<compile_context>
chip_gen: v5e
topology: v5e:2x2
jax: 0.10.0
libtpu: 0.0.40
codegen_flags: <defaults>
</compile_context>

<pallas_src>
import functools
import math

import jax
import jax.numpy as jnp
from jax.experimental import pallas as pl
from jax.experimental.pallas import tpu as pltpu


def _round_up(x, m):
    return (x + m - 1) // m * m


# --------------------------------------------------------------------------
# Pallas matmul: M/N/K-tiled, bf16 MXU inputs, f32 accumulation in the
# resident output block (K axis last / "arbitrary", M & N "parallel").
# --------------------------------------------------------------------------
def _matmul_kernel(a_ref, b_ref, o_ref):
    @pl.when(pl.program_id(2) == 0)
    def _init():
        o_ref[...] = jnp.zeros_like(o_ref)

    o_ref[...] += jnp.dot(a_ref[...], b_ref[...],
                          preferred_element_type=jnp.float32)


def _pick_tk(kp):
    # largest multiple of 128 that divides kp and is <= 512
    for cand in (512, 384, 256, 128):
        if cand <= kp and kp % cand == 0:
            return cand
    return kp


def pallas_matmul(a, b):
    """(M, K) @ (K, N) -> f32.  Inputs are cast to bf16 for the MXU."""
    M, K = a.shape
    K2, N = b.shape
    assert K == K2
    tm = 256 if M >= 256 else _round_up(M, 8)
    tn = 256 if N >= 256 else _round_up(N, 128)
    Kp = _round_up(K, 128)
    tk = _pick_tk(Kp)
    Mp = _round_up(M, tm)
    Np = _round_up(N, tn)
    a_p = jnp.pad(a.astype(jnp.bfloat16), ((0, Mp - M), (0, Kp - K)))
    b_p = jnp.pad(b.astype(jnp.bfloat16), ((0, Kp - K), (0, Np - N)))
    grid = (Mp // tm, Np // tn, Kp // tk)
    cost = pl.CostEstimate(
        flops=2 * Mp * Np * Kp,
        transcendentals=0,
        bytes_accessed=Mp * Kp * 2 + Kp * Np * 2 + Mp * Np * 4)
    out = pl.pallas_call(
        _matmul_kernel,
        out_shape=jax.ShapeDtypeStruct((Mp, Np), jnp.float32),
        grid_spec=pltpu.PrefetchScalarGridSpec(
            num_scalar_prefetch=0,
            grid=grid,
            in_specs=[pl.BlockSpec((tm, tk), lambda i, j, k: (i, k)),
                      pl.BlockSpec((tk, tn), lambda i, j, k: (k, j))],
            out_specs=pl.BlockSpec((tm, tn), lambda i, j, k: (i, j))),
        compiler_params=pltpu.CompilerParams(
            dimension_semantics=("parallel", "parallel", "arbitrary")),
        cost_estimate=cost,
    )(a_p, b_p)
    return out[:M, :N]


# --------------------------------------------------------------------------
# Row tiling helper for the memory-bound elementwise / reduction kernels.
# Keeps one (rows, C) f32 tile at ~1 MiB so double-buffered multi-input
# kernels stay well under the v5e 16 MiB scoped-VMEM default.
# --------------------------------------------------------------------------
def _row_tile(M, C, budget_bytes=1 << 20):
    rows = max(8, min(1024, (budget_bytes // (C * 4)) // 8 * 8))
    if M <= rows:
        return _round_up(M, 8)
    return rows


# --------------------------------------------------------------------------
# BatchNorm (training mode): two-pass Pallas pipeline.
#   pass 1: row-tiled column sum / sum-of-squares reduction (accumulated in a
#           resident (1, C) output block over an "arbitrary" row grid)
#   pass 2: row-tiled fused  y = x*scale + shift (+res) (+ReLU)
# --------------------------------------------------------------------------
def _colstats_kernel(x_ref, sum_ref, ssq_ref):
    @pl.when(pl.program_id(0) == 0)
    def _init():
        sum_ref[...] = jnp.zeros_like(sum_ref)
        ssq_ref[...] = jnp.zeros_like(ssq_ref)

    x = x_ref[...]
    sum_ref[...] += jnp.sum(x, axis=0, keepdims=True)
    ssq_ref[...] += jnp.sum(x * x, axis=0, keepdims=True)


def _pallas_colstats(x2d):
    M, C = x2d.shape
    tm = _row_tile(M, C)
    Mp = _round_up(M, tm)
    xp = jnp.pad(x2d, ((0, Mp - M), (0, 0)))  # zero rows contribute 0 to sums
    s, ss = pl.pallas_call(
        _colstats_kernel,
        out_shape=(jax.ShapeDtypeStruct((1, C), jnp.float32),
                   jax.ShapeDtypeStruct((1, C), jnp.float32)),
        grid=(Mp // tm,),
        in_specs=[pl.BlockSpec((tm, C), lambda i: (i, 0))],
        out_specs=[pl.BlockSpec((1, C), lambda i: (0, 0)),
                   pl.BlockSpec((1, C), lambda i: (0, 0))],
        compiler_params=pltpu.CompilerParams(
            dimension_semantics=("arbitrary",)),
    )(xp)
    return s[0], ss[0]


def _affine_kernel(x_ref, s_ref, b_ref, o_ref, *, relu):
    y = x_ref[...] * s_ref[...] + b_ref[...]
    if relu:
        y = jnp.maximum(y, 0.0)
    o_ref[...] = y


def _affine_add_relu_kernel(x_ref, r_ref, s_ref, b_ref, o_ref):
    y = x_ref[...] * s_ref[...] + b_ref[...] + r_ref[...]
    o_ref[...] = jnp.maximum(y, 0.0)


def _pallas_affine(x2d, scale, shift, relu, res2d=None):
    M, C = x2d.shape
    tm = _row_tile(M, C)
    Mp = _round_up(M, tm)
    pad = ((0, Mp - M), (0, 0))
    xp = jnp.pad(x2d, pad)
    scale2 = scale.reshape(1, C).astype(jnp.float32)
    shift2 = shift.reshape(1, C).astype(jnp.float32)
    row_spec = pl.BlockSpec((tm, C), lambda i: (i, 0))
    vec_spec = pl.BlockSpec((1, C), lambda i: (0, 0))
    params = pltpu.CompilerParams(dimension_semantics=("parallel",))
    if res2d is None:
        out = pl.pallas_call(
            functools.partial(_affine_kernel, relu=relu),
            out_shape=jax.ShapeDtypeStruct((Mp, C), jnp.float32),
            grid=(Mp // tm,),
            in_specs=[row_spec, vec_spec, vec_spec],
            out_specs=row_spec,
            compiler_params=params,
        )(xp, scale2, shift2)
    else:
        rp = jnp.pad(res2d, pad)
        out = pl.pallas_call(
            _affine_add_relu_kernel,
            out_shape=jax.ShapeDtypeStruct((Mp, C), jnp.float32),
            grid=(Mp // tm,),
            in_specs=[row_spec, row_spec, vec_spec, vec_spec],
            out_specs=row_spec,
            compiler_params=params,
        )(xp, rp, scale2, shift2)
    return out[:M]


def pallas_batchnorm(x2d, gamma, beta, relu, res2d=None, eps=1e-5):
    M, _ = x2d.shape
    s, ss = _pallas_colstats(x2d)
    mean = s / M
    var = jnp.maximum(ss / M - mean * mean, 0.0)   # biased (training-mode) var
    inv = jax.lax.rsqrt(var + eps)
    scale = gamma * inv
    shift = beta - mean * scale
    return _pallas_affine(x2d, scale, shift, relu, res2d)


# --------------------------------------------------------------------------
# MaxPool2d(kernel=3, stride=2, padding=1): 9 taps as separate row-tiled
# inputs to a pairwise-max kernel (no (9, M, C) stacked HBM tensor).
# --------------------------------------------------------------------------
def _max9_kernel(*refs):
    o_ref = refs[9]
    m = refs[0][...]
    for r in refs[1:9]:
        m = jnp.maximum(m, r[...])
    o_ref[...] = m


def pallas_maxpool_3x3_s2_p1(x):
    N, H, W, C = x.shape
    Ho = (H + 2 - 3) // 2 + 1
    Wo = (W + 2 - 3) // 2 + 1
    xp = jnp.pad(x, ((0, 0), (1, 1), (1, 1), (0, 0)),
                 constant_values=-1e30)
    M = N * Ho * Wo
    tm = _row_tile(M, C)
    Mp = _round_up(M, tm)
    taps = []
    for i in range(3):
        for j in range(3):
            s = jax.lax.slice(
                xp, (0, i, j, 0),
                (N, i + (Ho - 1) * 2 + 1, j + (Wo - 1) * 2 + 1, C),
                (1, 2, 2, 1)).reshape(M, C)
            taps.append(jnp.pad(s, ((0, Mp - M), (0, 0))))
    row_spec = pl.BlockSpec((tm, C), lambda i: (i, 0))
    out = pl.pallas_call(
        _max9_kernel,
        out_shape=jax.ShapeDtypeStruct((Mp, C), jnp.float32),
        grid=(Mp // tm,),
        in_specs=[row_spec] * 9,
        out_specs=row_spec,
        compiler_params=pltpu.CompilerParams(
            dimension_semantics=("parallel",)),
    )(*taps)
    return out[:M].reshape(N, Ho, Wo, C)


# --------------------------------------------------------------------------
# Conv (im2col glue + Pallas matmul)
# --------------------------------------------------------------------------
# TODO(synk): a direct-conv lowering (folding the kh*kw taps into the matmul K
#             grid axis and indexing offset windows of the padded NHWC input
#             via the A BlockSpec index_map) would avoid materializing the
#             kh*kw-wide im2col matrix in HBM for 3x3 convs; kept im2col (bf16).
def conv2d(x, w, stride, padding):
    """x: NHWC, w: PyTorch-style (O, Cin, kh, kw), bias=False."""
    N, H, W, Cin = x.shape
    O, _, kh, kw = w.shape
    Ho = (H + 2 * padding - kh) // stride + 1
    Wo = (W + 2 * padding - kw) // stride + 1
    xp = jnp.pad(x.astype(jnp.bfloat16),
                 ((0, 0), (padding, padding), (padding, padding), (0, 0)))
    patches = []
    for i in range(kh):
        for j in range(kw):
            patches.append(jax.lax.slice(
                xp, (0, i, j, 0),
                (N, i + (Ho - 1) * stride + 1, j + (Wo - 1) * stride + 1, Cin),
                (1, stride, stride, 1)))
    a = jnp.concatenate(patches, axis=-1).reshape(N * Ho * Wo, kh * kw * Cin)
    wmat = jnp.transpose(w, (2, 3, 1, 0)).reshape(kh * kw * Cin, O)
    wmat = wmat.astype(jnp.bfloat16)
    out = pallas_matmul(a, wmat)
    return out.reshape(N, Ho, Wo, O)


def bn2d(x, gb, relu):
    N, H, W, C = x.shape
    g, b = gb
    y = pallas_batchnorm(x.reshape(-1, C), g, b, relu)
    return y.reshape(N, H, W, C)


# --------------------------------------------------------------------------
# Deterministic parameter construction (ResNet-50 shapes)
# --------------------------------------------------------------------------
class ParamGen:
    def __init__(self, seed):
        self._key = jax.random.PRNGKey(seed)

    def _next(self):
        self._key, sub = jax.random.split(self._key)
        return sub

    def conv(self, out_ch, in_ch, kh, kw):
        scale = math.sqrt(2.0 / (in_ch * kh * kw))
        return jax.random.normal(self._next(), (out_ch, in_ch, kh, kw),
                                 jnp.float32) * scale


def _bn_params(c):
    return jnp.ones((c,), jnp.float32), jnp.zeros((c,), jnp.float32)


def make_bottleneck(pg, in_ch, planes, stride, downsample):
    out_ch = planes * 4
    p = {
        'conv1': pg.conv(planes, in_ch, 1, 1),
        'bn1': _bn_params(planes),
        'conv2': pg.conv(planes, planes, 3, 3),
        'bn2': _bn_params(planes),
        'conv3': pg.conv(out_ch, planes, 1, 1),
        'bn3': _bn_params(out_ch),
        'stride': stride,
    }
    if downsample:
        p['ds_conv'] = pg.conv(out_ch, in_ch, 1, 1)
        p['ds_bn'] = _bn_params(out_ch)
    return p


def make_layer(pg, in_ch, planes, blocks, stride):
    layer = [make_bottleneck(pg, in_ch, planes, stride, True)]
    for _ in range(blocks - 1):
        layer.append(make_bottleneck(pg, planes * 4, planes, 1, False))
    return layer


def make_resnet50_params(seed=0):
    pg = ParamGen(seed)
    return {
        'conv1': pg.conv(64, 3, 7, 7),
        'bn1': _bn_params(64),
        'layer1': make_layer(pg, 64, 64, 3, 1),
        'layer2': make_layer(pg, 256, 128, 4, 2),
        'layer3': make_layer(pg, 512, 256, 6, 2),
        'layer4': make_layer(pg, 1024, 512, 3, 2),
    }


# --------------------------------------------------------------------------
# Forward pass (matches Resnet50_truncated.forward)
# --------------------------------------------------------------------------
def bottleneck_forward(x, p):
    stride = p['stride']
    out = conv2d(x, p['conv1'], 1, 0)
    out = bn2d(out, p['bn1'], relu=True)
    out = conv2d(out, p['conv2'], stride, 1)
    out = bn2d(out, p['bn2'], relu=True)
    out = conv2d(out, p['conv3'], 1, 0)
    if 'ds_conv' in p:
        identity = conv2d(x, p['ds_conv'], stride, 0)
        identity = bn2d(identity, p['ds_bn'], relu=False)
    else:
        identity = x
    N, H, W, C = out.shape
    g, b = p['bn3']
    y = pallas_batchnorm(out.reshape(-1, C), g, b, relu=True,
                         res2d=identity.reshape(-1, C))
    return y.reshape(N, H, W, C)


def resnet50_truncated_forward(x_nchw, params):
    x = jnp.transpose(x_nchw.astype(jnp.float32), (0, 2, 3, 1))  # -> NHWC
    # layers_set_1: conv1 / bn1 / relu / maxpool / layer1
    x = conv2d(x, params['conv1'], 2, 3)
    x = bn2d(x, params['bn1'], relu=True)
    x = pallas_maxpool_3x3_s2_p1(x)
    outs = []
    for name in ('layer1', 'layer2', 'layer3', 'layer4'):
        for blk in params[name]:
            x = bottleneck_forward(x, blk)
        outs.append(x)
    # back to NCHW then .squeeze(), exactly like the PyTorch module returns
    return [jnp.squeeze(jnp.transpose(o, (0, 3, 1, 2))) for o in outs]


# --------------------------------------------------------------------------
if __name__ == "__main__":
    key = jax.random.PRNGKey(0)
    x = jax.random.normal(key, (2, 3, 32, 32), jnp.float32)  # small NCHW input

    params = make_resnet50_params(seed=0)
    outs = resnet50_truncated_forward(x, params)
    outs = [jax.block_until_ready(o) for o in outs]

    expected = [(2, 256, 8, 8), (2, 512, 4, 4), (2, 1024, 2, 2), (2, 2048)]
    for o, e in zip(outs, expected):
        assert o.shape == tuple(e), (o.shape, e)
        assert bool(jnp.all(jnp.isfinite(o)))
    print("KERNEL_OK")
</pallas_src>

<mosaic_0001>
module attributes {stable_mosaic.version = 11 : i64} {
  func.func @_matmul_kernel(%arg0: i32, %arg1: i32, %arg2: i32, %arg3: memref<256x256xbf16, #tpu.memory_space<vmem>>, %arg4: memref<256x128xbf16, #tpu.memory_space<vmem>>, %arg5: memref<256x128xf32, #tpu.memory_space<vmem>>) attributes {dimension_semantics = [#tpu.dimension_semantics<parallel>, #tpu.dimension_semantics<parallel>, #tpu.dimension_semantics<arbitrary>], iteration_bounds = array<i64: 2, 1, 1>, scalar_prefetch = 0 : i64, scratch_operands = 0 : i64, tpu.core_type = #tpu.core_type<tc>, window_params = [{transform_indices = @transform_0, window_bounds = array<i64: 256, 256>}, {transform_indices = @transform_1, window_bounds = array<i64: 256, 128>}, {transform_indices = @transform_2, window_bounds = array<i64: 256, 128>}]} {
    %c0_i32 = arith.constant 0 : i32
    %0 = arith.cmpi eq, %arg2, %c0_i32 : i32
    %1 = arith.extui %0 : i1 to i32
    %c0_i32_0 = arith.constant 0 : i32
    %2 = arith.cmpi ne, %1, %c0_i32_0 : i32
    scf.if %2 {
      %cst_8 = arith.constant 0.000000e+00 : f32
      %9 = vector.broadcast %cst_8 : f32 to vector<256x128xf32>
      %c0_9 = arith.constant 0 : index
      %c0_10 = arith.constant 0 : index
      %10 = vector.load %arg5[%c0_9, %c0_10] : memref<256x128xf32, #tpu.memory_space<vmem>>, vector<256x128xf32>
      tpu.vector_store %arg5[%c0_9, %c0_10], %9 {strides = array<i32>} : memref<256x128xf32, #tpu.memory_space<vmem>>, vector<256x128xf32>,
    } else {
    }
    %c0 = arith.constant 0 : index
    %c0_1 = arith.constant 0 : index
    %3 = vector.load %arg5[%c0, %c0_1] : memref<256x128xf32, #tpu.memory_space<vmem>>, vector<256x128xf32>
    %c0_2 = arith.constant 0 : index
    %c0_3 = arith.constant 0 : index
    %4 = vector.load %arg3[%c0_2, %c0_3] : memref<256x256xbf16, #tpu.memory_space<vmem>>, vector<256x256xbf16>
    %c0_4 = arith.constant 0 : index
    %c0_5 = arith.constant 0 : index
    %5 = vector.load %arg4[%c0_4, %c0_5] : memref<256x128xbf16, #tpu.memory_space<vmem>>, vector<256x128xbf16>
    %cst = arith.constant dense<0.000000e+00> : vector<256x128xf32>
    %6 = tpu.matmul %4, %5, %cst {dimension_numbers = #tpu.dot_dimension_numbers<[1], [0], [0], [1], [0, 0, 1, 1], [], []>} : vector<256x256xbf16>, vector<256x128xbf16>, vector<256x128xf32> -> vector<256x128xf32>
    %7 = arith.addf %3, %6 : vector<256x128xf32>
    %c0_6 = arith.constant 0 : index
    %c0_7 = arith.constant 0 : index
    %8 = vector.load %arg5[%c0_6, %c0_7] : memref<256x128xf32, #tpu.memory_space<vmem>>, vector<256x128xf32>
    tpu.vector_store %arg5[%c0_6, %c0_7], %7 {strides = array<i32>} : memref<256x128xf32, #tpu.memory_space<vmem>>, vector<256x128xf32>,
    return
  }
  func.func @transform_0(%arg0: i32, %arg1: i32, %arg2: i32) -> (i32, i32) {
    %c0_i32 = arith.constant 0 : i32
    return %arg0, %arg2 : i32, i32
  }
  func.func @transform_1(%arg0: i32, %arg1: i32, %arg2: i32) -> (i32, i32) {
    %c0_i32 = arith.constant 0 : i32
    return %arg2, %arg1 : i32, i32
  }
  func.func @transform_2(%arg0: i32, %arg1: i32, %arg2: i32) -> (i32, i32) {
    %c0_i32 = arith.constant 0 : i32
    return %arg0, %arg1 : i32, i32
  }
}

</mosaic_0001>

<llo_original>
// kernel: tpu_custom_call.1
$region0: #{tpu_custom_call.1}
  #allocation0 [shape = 'u32[]', space=smem, size = 0x4, offset = 0x4, fixed_abs, tag = 'smem constant byte address 0x4 - core index']
  #allocation1 [shape = 'u32[72,128]{1,0:T(1,128)}', space=vmem, size = 0x9000, scoped, tag = 'internal scratch']
  %s0 = inlined_call_operand.hbm [shape: bf16[512,256], index: 0, kind: input, shape index: {}]
  %s1 = inlined_call_operand.hbm [shape: bf16[256,128], index: 1, kind: input, shape index: {}]
  %s2 = inlined_call_operand.hbm [shape: f32[512,128], index: 2, kind: output, shape index: {}]
  %s3 = sld [smem:[#allocation0]]
  $region53: #{tpu_custom_call.1} parent=0
    _
  %s5 = ssub.s32 1, %s3
  %s6 = scalar_select 0, %s5, %s3
  $region1: #{tpu_custom_call.1} parent=0
    #allocation2 [shape = 'u8[262144]{0}', space=vmem, size = 0x40000, scoped, tag = 'input window, operand 0']
    #allocation3 [shape = 's32[2]{0}', space=sflag, size = 0x8, scoped, tag = 'scoped memory for tpu_custom_call.1']
    #allocation4 [shape = 's32[2]{0}', space=sflag, size = 0x8, scoped, tag = 'scoped memory for tpu_custom_call.1']
    #allocation5 [shape = 'u8[65536]{0}', space=vmem, size = 0x10000, scoped, tag = 'input window, operand 1, single buffered']
    #allocation6 [shape = 's32[1]{0}', space=sflag, size = 0x4, scoped, tag = 'scoped memory for tpu_custom_call.1']
    #allocation7 [shape = 'u8[262144]{0}', space=vmem, size = 0x40000, scoped, tag = 'output window, operand 0']
    %7 = vsyncpa [#allocation3], 0
    %s8 = scalar_lea.sflag [#allocation3], 1
    %9 = vsyncpa %s8, 0
    %10 = vsyncpa [#allocation6], 0
    %11 = vsyncpa [#allocation4], 0
    %s12 = scalar_lea.sflag [#allocation4], 1
    %13 = vsyncpa %s12, 0
    loop: start=0, step=1, limit=4
    $region2: #{tpu_custom_call.1} parent=1 // loop_pre_header
      _
    $region3: #{tpu_custom_call.1} parent=1 // loop_header
      %s15 = sphi 0, %s19
      %p16 = scmp.ge.s32.totalorder %s15, 4
      %s22 = sphi 0, %s41
      %s23 = sphi 0, %s37
      %s24 = sphi 0, %s33
      %s25 = sphi 0, %s22
      %s26 = sphi 0, %s23
      %s27 = sphi 0, %s24
      %s28 = sphi 0, %s25
      %s29 = sphi 0, %s26
      %s30 = sphi 0, %s27
      %s46 = sphi 0, %s48
      %s49 = sphi 0, %s46
      %s50 = sphi 0, %s49
      %s66 = sphi 0, %s50
      %s74 = sphi 0, %s76
      %s77 = sphi 0, %s74
      %s78 = sphi 0, %s77
      %s94 = sphi 0, %s78
      %s102 = sphi 0, %s104
      %s105 = sphi 0, %s102
      %s106 = sphi 0, %s105
      %s122 = sphi 0, %s106
    $region4: #{tpu_custom_call.1} parent=1 // loop_header_branch
      %18 = sbr.rel (%p16) target = $region8
    $region5: #{tpu_custom_call.1} parent=1 // loop_body
      %s20 = ssub.s32 %s15, 1
      %s21 = ssub.s32 %s15, 2
      %s31 = sadd.s32 1, %s24
      %p32 = scmp.ge.s32.totalorder %s31, 1
      %s33 = scalar_select %p32, 0, %s31
      %s34 = sadd.s32 1, %s23
      %s35 = scalar_select %p32, %s34, %s23
      %p36 = scmp.ge.s32.totalorder %s35, 1
      %s37 = scalar_select %p36, 0, %s35
      %s38 = sadd.s32 1, %s22
      %s39 = scalar_select %p36, %s38, %s22
      %p40 = scmp.ge.s32.totalorder %s39, 2
      %s41 = scalar_select %p40, 0, %s39
      %s42 = ssub.s32 %s22, %s41
      %s43 = ssub.s32 %s24, %s33
      %s44 = sor.u32 %s42, %s43
      %p45 = scmp.eq.s32.totalorder %s44, 0
      %s47 = sadd.s32 %s46, 1
      %s48 = scalar_select %p45, %s46, %s47
      %p51 = pneg %p45
      %p52 = scmp.eq.s32.totalorder %s15, 1
      %p53 = por %p51, %p52
      %p54 = scmp.ne.s32.totalorder %s46, %s49
      %p55 = scmp.eq.s32.totalorder %s15, 0
      %p56 = por %p54, %p55
      %p57 = scmp.ne.s32.totalorder %s46, %s49
      %p58 = scmp.eq.s32.totalorder %s20, 1
      %p59 = por %p57, %p58
      %p60 = scmp.ne.s32.totalorder %s49, %s50
      %p61 = scmp.eq.s32.totalorder %s20, 0
      %p62 = por %p60, %p61
      %p63 = scmp.ne.s32.totalorder %s49, %s50
      %p64 = scmp.eq.s32.totalorder %s21, 1
      %p65 = por %p63, %p64
      %p67 = scmp.ne.s32.totalorder %s50, %s66
      %p68 = scmp.eq.s32.totalorder %s21, 0
      %p69 = por %p67, %p68
      %s70 = ssub.s32 %s24, %s33
      %s71 = ssub.s32 %s23, %s37
      %s72 = sor.u32 %s70, %s71
      %p73 = scmp.eq.s32.totalorder %s72, 0
      %s75 = sadd.s32 %s74, 1
      %s76 = scalar_select %p73, %s74, %s75
      %p79 = pneg %p73
      %p80 = scmp.eq.s32.totalorder %s15, 1
      %p81 = por %p79, %p80
      %p82 = scmp.ne.s32.totalorder %s74, %s77
      %p83 = scmp.eq.s32.totalorder %s15, 0
      %p84 = por %p82, %p83
      %p85 = scmp.ne.s32.totalorder %s74, %s77
      %p86 = scmp.eq.s32.totalorder %s20, 1
      %p87 = por %p85, %p86
      %p88 = scmp.ne.s32.totalorder %s77, %s78
      %p89 = scmp.eq.s32.totalorder %s20, 0
      %p90 = por %p88, %p89
      %p91 = scmp.ne.s32.totalorder %s77, %s78
      %p92 = scmp.eq.s32.totalorder %s21, 1
      %p93 = por %p91, %p92
      %p95 = scmp.ne.s32.totalorder %s78, %s94
      %p96 = scmp.eq.s32.totalorder %s21, 0
      %p97 = por %p95, %p96
      %s98 = ssub.s32 %s22, %s41
      %s99 = ssub.s32 %s23, %s37
      %s100 = sor.u32 %s98, %s99
      %p101 = scmp.eq.s32.totalorder %s100, 0
      %s103 = sadd.s32 %s102, 1
      %s104 = scalar_select %p101, %s102, %s103
      %p107 = pneg %p101
      %p108 = scmp.eq.s32.totalorder %s15, 1
      %p109 = por %p107, %p108
      %p110 = scmp.ne.s32.totalorder %s102, %s105
      %p111 = scmp.eq.s32.totalorder %s15, 0
      %p112 = por %p110, %p111
      %p113 = scmp.ne.s32.totalorder %s102, %s105
      %p114 = scmp.eq.s32.totalorder %s20, 1
      %p115 = por %p113, %p114
      %p116 = scmp.ne.s32.totalorder %s105, %s106
      %p117 = scmp.eq.s32.totalorder %s20, 0
      %p118 = por %p116, %p117
      %p119 = scmp.ne.s32.totalorder %s105, %s106
      %p120 = scmp.eq.s32.totalorder %s21, 1
      %p121 = por %p119, %p120
      %p123 = scmp.ne.s32.totalorder %s106, %s122
      %p124 = scmp.eq.s32.totalorder %s21, 0
      %p125 = por %p123, %p124
      %p126 = scmp.le.s32.totalorder 1, %s15
      %p127 = scmp.lt.s32.totalorder %s15, 3
      %p128 = pnand %p126, %p127
      %p129 = pneg %p128
      // Predicated region
      $region9: #{tpu_custom_call.1} parent=5 // pred_check
        _
      $region10: #{tpu_custom_call.1} parent=5 // pred_check_branch
        %131 = sbr.rel (%p128) target = $region12
      $region11: #{tpu_custom_call.1} parent=5 // pred_region
        %s132 = ssub.s32 %s15, 1
        // Predicated region
        $region13: #{tpu_custom_call.1} parent=11 // pred_check
          %p133 = pneg %p90
        $region14: #{tpu_custom_call.1} parent=11 // pred_check_branch
          %135 = sbr.rel (%p133) target = $region16
        $region15: #{tpu_custom_call.1} parent=11 // pred_region
          %s136 = smul.u32 32, %s27
          %138 = vsyncadd [#allocation6], 0
          %s139 = sadd.s32 %s26, %s136
          %s140 = smul.addr %s139, 4
          %s141 = scalar_lea.hbm %s1, %s140
          %s142 = sshll.u32 %s141, 4
          %s143 = int_to_ptr.hbm [resolvable:$true] %s142
          %s144 = sshll.u32 [#allocation5], 4
          %s145 = int_to_ptr.vmem [resolvable:$true] %s144
          %150 = dma.hbm_to_vmem [thread:$0]  %s143, 2048, %s145, [#allocation6], 64, 64, 4
        $region16: #{tpu_custom_call.1} parent=11 // pred_fallthru
          _
      $region12: #{tpu_custom_call.1} parent=5 // pred_fallthru
        _
      %p151 = scmp.lt.s32.totalorder %s15, 2
      // Predicated region
      $region17: #{tpu_custom_call.1} parent=5 // pred_check
        %p152 = pneg %p151
      $region18: #{tpu_custom_call.1} parent=5 // pred_check_branch
        %154 = sbr.rel (%p152) target = $region20
      $region19: #{tpu_custom_call.1} parent=5 // pred_region
        // Predicated region
        $region21: #{tpu_custom_call.1} parent=19 // pred_check
          %p155 = pneg %p56
        $region22: #{tpu_custom_call.1} parent=19 // pred_check_branch
          %157 = sbr.rel (%p155) target = $region24
        $region23: #{tpu_custom_call.1} parent=19 // pred_region
          %s158 = sand.u32 %s46, 1
          %s159 = scalar_lea.sflag [#allocation3], %s158
          %s160 = sand.u32 %s46, 1
          %s161 = smul.addr %s160, 256
          %s162 = scalar_lea.vmem [#allocation2], %s161
          %s163 = smul.u32 32, %s22
          %s164 = smul.u32 2, %s24
          %166 = vsyncadd %s159, 0
          %s167 = smul.addr %s163, 2
          %s168 = sadd.s32 %s164, %s167
          %s169 = smul.addr %s168, 4
          %s170 = scalar_lea.hbm %s0, %s169
          %s171 = sshll.u32 %s170, 4
          %s172 = int_to_ptr.hbm [resolvable:$true] %s171
          %s173 = sshll.u32 %s162, 4
          %s174 = int_to_ptr.vmem [resolvable:$true] %s173
          %179 = dma.hbm_to_vmem [thread:$0]  %s172, 4096, %s174, %s159, 128, 128, 8
        $region24: #{tpu_custom_call.1} parent=19 // pred_fallthru
          _
      $region20: #{tpu_custom_call.1} parent=5 // pred_fallthru
        _
      %p180 = scmp.le.s32.totalorder 1, %s15
      %p181 = scmp.lt.s32.totalorder %s15, 3
      %p182 = pnand %p180, %p181
      %p183 = pneg %p182
      // Predicated region
      $region25: #{tpu_custom_call.1} parent=5 // pred_check
        _
      $region26: #{tpu_custom_call.1} parent=5 // pred_check_branch
        %185 = sbr.rel (%p182) target = $region28
      $region27: #{tpu_custom_call.1} parent=5 // pred_region
        %s186 = ssub.s32 %s15, 1
        %s187 = sand.u32 %s49, 1
        %s188 = scalar_lea.sflag [#allocation3], %s187
        %s189 = sand.u32 %s49, 1
        %s190 = smul.addr %s189, 256
        %s191 = scalar_lea.vmem [#allocation2], %s190
        // Predicated region
        $region29: #{tpu_custom_call.1} parent=27 // pred_check
          %p192 = pneg %p62
        $region30: #{tpu_custom_call.1} parent=27 // pred_check_branch
          %194 = sbr.rel (%p192) target = $region32
        $region31: #{tpu_custom_call.1} parent=27 // pred_region
          %196 = dma.done %s188, 4096
        $region32: #{tpu_custom_call.1} parent=27 // pred_fallthru
          _
        // Predicated region
        $region33: #{tpu_custom_call.1} parent=27 // pred_check
          %p197 = pneg %p90
        $region34: #{tpu_custom_call.1} parent=27 // pred_check_branch
          %199 = sbr.rel (%p197) target = $region36
        $region35: #{tpu_custom_call.1} parent=27 // pred_region
          %201 = dma.done [#allocation6], 2048
        $region36: #{tpu_custom_call.1} parent=27 // pred_fallthru
          _
        %s202 = sand.u32 %s49, 1
        %s203 = scalar_lea.sflag [#allocation3], %s202
        %s204 = sand.u32 %s49, 1
        %s205 = smul.addr %s204, 256
        %s206 = scalar_lea.vmem [#allocation2], %s205
        %p207 = pneg %p62
        %p208 = pneg %p59
        %p209 = pneg %p90
        %p210 = pneg %p87
        %p211 = pneg %p118
        %p212 = pneg %p115
        %s213 = sand.u32 %s105, 1
        %s214 = scalar_lea.sflag [#allocation4], %s213
        %s215 = sand.u32 %s105, 1
        %s216 = smul.addr %s215, 256
        %s217 = scalar_lea.vmem [#allocation7], %s216
        %s218 = smul.u32 32, %s25
        %s219 = smul.u32 2, %s27
        %s220 = smul.u32 32, %s27
        %s221 = smul.u32 32, %s25
        %p222 = scmp.eq.s32.totalorder %s27, 0
        // Predicated region
        $region37: #{tpu_custom_call.1} parent=27 // pred_check
          %p223 = pneg %p222
        $region38: #{tpu_custom_call.1} parent=27 // pred_check_branch
          %225 = sbr.rel (%p223) target = $region40
        $region39: #{tpu_custom_call.1} parent=27 // pred_region
          %226 = vst [vmem:[%s217] sm:$0xff] 0.0
          %227 = vst [vmem:[%s217 + $0x8] sm:$0xff] 0.0
          %228 = vst [vmem:[%s217 + $0x10] sm:$0xff] 0.0
          %229 = vst [vmem:[%s217 + $0x18] sm:$0xff] 0.0
          %230 = vst [vmem:[%s217 + $0x20] sm:$0xff] 0.0
          %231 = vst [vmem:[%s217 + $0x28] sm:$0xff] 0.0
          %232 = vst [vmem:[%s217 + $0x30] sm:$0xff] 0.0
          %233 = vst [vmem:[%s217 + $0x38] sm:$0xff] 0.0
          %234 = vst [vmem:[%s217 + $0x40] sm:$0xff] 0.0
          %235 = vst [vmem:[%s217 + $0x48] sm:$0xff] 0.0
          %236 = vst [vmem:[%s217 + $0x50] sm:$0xff] 0.0
          %237 = vst [vmem:[%s217 + $0x58] sm:$0xff] 0.0
          %238 = vst [vmem:[%s217 + $0x60] sm:$0xff] 0.0
          %239 = vst [vmem:[%s217 + $0x68] sm:$0xff] 0.0
          %240 = vst [vmem:[%s217 + $0x70] sm:$0xff] 0.0
          %241 = vst [vmem:[%s217 + $0x78] sm:$0xff] 0.0
          %242 = vst [vmem:[%s217 + $0x80] sm:$0xff] 0.0
          %243 = vst [vmem:[%s217 + $0x88] sm:$0xff] 0.0
          %244 = vst [vmem:[%s217 + $0x90] sm:$0xff] 0.0
          %245 = vst [vmem:[%s217 + $0x98] sm:$0xff] 0.0
          %246 = vst [vmem:[%s217 + $0xa0] sm:$0xff] 0.0
          %247 = vst [vmem:[%s217 + $0xa8] sm:$0xff] 0.0
          %248 = vst [vmem:[%s217 + $0xb0] sm:$0xff] 0.0
          %249 = vst [vmem:[%s217 + $0xb8] sm:$0xff] 0.0
          %250 = vst [vmem:[%s217 + $0xc0] sm:$0xff] 0.0
          %251 = vst [vmem:[%s217 + $0xc8] sm:$0xff] 0.0
          %252 = vst [vmem:[%s217 + $0xd0] sm:$0xff] 0.0
          %253 = vst [vmem:[%s217 + $0xd8] sm:$0xff] 0.0
          %254 = vst [vmem:[%s217 + $0xe0] sm:$0xff] 0.0
          %255 = vst [vmem:[%s217 + $0xe8] sm:$0xff] 0.0
          %256 = vst [vmem:[%s217 + $0xf0] sm:$0xff] 0.0
          %257 = vst [vmem:[%s217 + $0xf8] sm:$0xff] 0.0
        $region40: #{tpu_custom_call.1} parent=27 // pred_fallthru
          _
        %v258 = vld [vmem:[%s217] sm:$0xff]
        %v259 = vld [vmem:[%s217 + $0x8] sm:$0xff]
        %v260 = vld [vmem:[%s217 + $0x10] sm:$0xff]
        %v261 = vld [vmem:[%s217 + $0x18] sm:$0xff]
        %v262 = vld [vmem:[%s217 + $0x20] sm:$0xff]
        %v263 = vld [vmem:[%s217 + $0x28] sm:$0xff]
        %v264 = vld [vmem:[%s217 + $0x30] sm:$0xff]
        %v265 = vld [vmem:[%s217 + $0x38] sm:$0xff]
        %v266 = vld [vmem:[%s217 + $0x40] sm:$0xff]
        %v267 = vld [vmem:[%s217 + $0x48] sm:$0xff]
        %v268 = vld [vmem:[%s217 + $0x50] sm:$0xff]
        %v269 = vld [vmem:[%s217 + $0x58] sm:$0xff]
        %v270 = vld [vmem:[%s217 + $0x60] sm:$0xff]
        %v271 = vld [vmem:[%s217 + $0x68] sm:$0xff]
        %v272 = vld [vmem:[%s217 + $0x70] sm:$0xff]
        %v273 = vld [vmem:[%s217 + $0x78] sm:$0xff]
        %v274 = vld [vmem:[%s217 + $0x80] sm:$0xff]
        %v275 = vld [vmem:[%s217 + $0x88] sm:$0xff]
        %v276 = vld [vmem:[%s217 + $0x90] sm:$0xff]
        %v277 = vld [vmem:[%s217 + $0x98] sm:$0xff]
        %v278 = vld [vmem:[%s217 + $0xa0] sm:$0xff]
        %v279 = vld [vmem:[%s217 + $0xa8] sm:$0xff]
        %v280 = vld [vmem:[%s217 + $0xb0] sm:$0xff]
        %v281 = vld [vmem:[%s217 + $0xb8] sm:$0xff]
        %v282 = vld [vmem:[%s217 + $0xc0] sm:$0xff]
        %v283 = vld [vmem:[%s217 + $0xc8] sm:$0xff]
        %v284 = vld [vmem:[%s217 + $0xd0] sm:$0xff]
        %v285 = vld [vmem:[%s217 + $0xd8] sm:$0xff]
        %v286 = vld [vmem:[%s217 + $0xe0] sm:$0xff]
        %v287 = vld [vmem:[%s217 + $0xe8] sm:$0xff]
        %v288 = vld [vmem:[%s217 + $0xf0] sm:$0xff]
        %v289 = vld [vmem:[%s217 + $0xf8] sm:$0xff]
        %v290 = vld [vmem:[%s191] sm:$0xff]
        %v291 = vld [vmem:[%s191 + $0x8] sm:$0xff]
        %v292 = vld [vmem:[%s191 + $0x10] sm:$0xff]
        %v293 = vld [vmem:[%s191 + $0x18] sm:$0xff]
        %v294 = vld [vmem:[%s191 + $0x20] sm:$0xff]
        %v295 = vld [vmem:[%s191 + $0x28] sm:$0xff]
        %v296 = vld [vmem:[%s191 + $0x30] sm:$0xff]
        %v297 = vld [vmem:[%s191 + $0x38] sm:$0xff]
        %v298 = vld [vmem:[%s191 + $0x40] sm:$0xff]
        %v299 = vld [vmem:[%s191 + $0x48] sm:$0xff]
        %v300 = vld [vmem:[%s191 + $0x50] sm:$0xff]
        %v301 = vld [vmem:[%s191 + $0x58] sm:$0xff]
        %v302 = vld [vmem:[%s191 + $0x60] sm:$0xff]
        %v303 = vld [vmem:[%s191 + $0x68] sm:$0xff]
        %v304 = vld [vmem:[%s191 + $0x70] sm:$0xff]
        %v305 = vld [vmem:[%s191 + $0x78] sm:$0xff]
        %v306 = vld [vmem:[%s191 + $0x80] sm:$0xff]
        %v307 = vld [vmem:[%s191 + $0x88] sm:$0xff]
        %v308 = vld [vmem:[%s191 + $0x90] sm:$0xff]
        %v309 = vld [vmem:[%s191 + $0x98] sm:$0xff]
        %v310 = vld [vmem:[%s191 + $0xa0] sm:$0xff]
        %v311 = vld [vmem:[%s191 + $0xa8] sm:$0xff]
        %v312 = vld [vmem:[%s191 + $0xb0] sm:$0xff]
        %v313 = vld [vmem:[%s191 + $0xb8] sm:$0xff]
        %v314 = vld [vmem:[%s191 + $0xc0] sm:$0xff]
        %v315 = vld [vmem:[%s191 + $0xc8] sm:$0xff]
        %v316 = vld [vmem:[%s191 + $0xd0] sm:$0xff]
        %v317 = vld [vmem:[%s191 + $0xd8] sm:$0xff]
        %v318 = vld [vmem:[%s191 + $0xe0] sm:$0xff]
        %v319 = vld [vmem:[%s191 + $0xe8] sm:$0xff]
        %v320 = vld [vmem:[%s191 + $0xf0] sm:$0xff]
        %v321 = vld [vmem:[%s191 + $0xf8] sm:$0xff]
        %v322 = vld [vmem:[#allocation5] sm:$0xf]
        %v323 = vld [vmem:[#allocation5 + $0x4] sm:$0xf]
        %v324 = vld [vmem:[#allocation5 + $0x8] sm:$0xf]
        %v325 = vld [vmem:[#allocation5 + $0xc] sm:$0xf]
        %v326 = vld [vmem:[#allocation5 + $0x10] sm:$0xf]
        %v327 = vld [vmem:[#allocation5 + $0x14] sm:$0xf]
        %v328 = vld [vmem:[#allocation5 + $0x18] sm:$0xf]
        %v329 = vld [vmem:[#allocation5 + $0x1c] sm:$0xf]
        %v330 = vld [vmem:[#allocation5 + $0x20] sm:$0xf]
        %v331 = vld [vmem:[#allocation5 + $0x24] sm:$0xf]
        %v332 = vld [vmem:[#allocation5 + $0x28] sm:$0xf]
        %v333 = vld [vmem:[#allocation5 + $0x2c] sm:$0xf]
        %v334 = vld [vmem:[#allocation5 + $0x30] sm:$0xf]
        %v335 = vld [vmem:[#allocation5 + $0x34] sm:$0xf]
        %v336 = vld [vmem:[#allocation5 + $0x38] sm:$0xf]
        %v337 = vld [vmem:[#allocation5 + $0x3c] sm:$0xf]
        %v338 = vld [vmem:[#allocation5 + $0x40] sm:$0xf]
        %v339 = vld [vmem:[#allocation5 + $0x44] sm:$0xf]
        %v340 = vld [vmem:[#allocation5 + $0x48] sm:$0xf]
        %v341 = vld [vmem:[#allocation5 + $0x4c] sm:$0xf]
        %v342 = vld [vmem:[#allocation5 + $0x50] sm:$0xf]
        %v343 = vld [vmem:[#allocation5 + $0x54] sm:$0xf]
        %v344 = vld [vmem:[#allocation5 + $0x58] sm:$0xf]
        %v345 = vld [vmem:[#allocation5 + $0x5c] sm:$0xf]
        %v346 = vld [vmem:[#allocation5 + $0x60] sm:$0xf]
        %v347 = vld [vmem:[#allocation5 + $0x64] sm:$0xf]
        %v348 = vld [vmem:[#allocation5 + $0x68] sm:$0xf]
        %v349 = vld [vmem:[#allocation5 + $0x6c] sm:$0xf]
        %v350 = vld [vmem:[#allocation5 + $0x70] sm:$0xf]
        %v351 = vld [vmem:[#allocation5 + $0x74] sm:$0xf]
        %v352 = vld [vmem:[#allocation5 + $0x78] sm:$0xf]
        %v353 = vld [vmem:[#allocation5 + $0x7c] sm:$0xf]
        %v386 = vunpack.c.l.b16 %v290
        %v387 = vunpack.c.h.b16 %v290
        %v388 = vunpack.c.l.b16 %v291
        %v389 = vunpack.c.h.b16 %v291
        %v390 = vunpack.c.l.b16 %v292
        %v391 = vunpack.c.h.b16 %v292
        %v392 = vunpack.c.l.b16 %v293
        %v393 = vunpack.c.h.b16 %v293
        %v394 = vunpack.c.l.b16 %v294
        %v395 = vunpack.c.h.b16 %v294
        %v396 = vunpack.c.l.b16 %v295
        %v397 = vunpack.c.h.b16 %v295
        %v398 = vunpack.c.l.b16 %v296
        %v399 = vunpack.c.h.b16 %v296
        %v400 = vunpack.c.l.b16 %v297
        %v401 = vunpack.c.h.b16 %v297
        %v402 = vunpack.c.l.b16 %v298
        %v403 = vunpack.c.h.b16 %v298
        %v404 = vunpack.c.l.b16 %v299
        %v405 = vunpack.c.h.b16 %v299
        %v406 = vunpack.c.l.b16 %v300
        %v407 = vunpack.c.h.b16 %v300
        %v408 = vunpack.c.l.b16 %v301
        %v409 = vunpack.c.h.b16 %v301
        %v410 = vunpack.c.l.b16 %v302
        %v411 = vunpack.c.h.b16 %v302
        %v412 = vunpack.c.l.b16 %v303
        %v413 = vunpack.c.h.b16 %v303
        %v414 = vunpack.c.l.b16 %v304
        %v415 = vunpack.c.h.b16 %v304
        %v416 = vunpack.c.l.b16 %v305
        %v417 = vunpack.c.h.b16 %v305
        %v418 = vunpack.c.l.b16 %v306
        %v419 = vunpack.c.h.b16 %v306
        %v420 = vunpack.c.l.b16 %v307
        %v421 = vunpack.c.h.b16 %v307
        %v422 = vunpack.c.l.b16 %v308
        %v423 = vunpack.c.h.b16 %v308
        %v424 = vunpack.c.l.b16 %v309
        %v425 = vunpack.c.h.b16 %v309
        %v426 = vunpack.c.l.b16 %v310
        %v427 = vunpack.c.h.b16 %v310
        %v428 = vunpack.c.l.b16 %v311
        %v429 = vunpack.c.h.b16 %v311
        %v430 = vunpack.c.l.b16 %v312
        %v431 = vunpack.c.h.b16 %v312
        %v432 = vunpack.c.l.b16 %v313
        %v433 = vunpack.c.h.b16 %v313
        %v434 = vunpack.c.l.b16 %v314
        %v435 = vunpack.c.h.b16 %v314
        %v436 = vunpack.c.l.b16 %v315
        %v437 = vunpack.c.h.b16 %v315
        %v438 = vunpack.c.l.b16 %v316
        %v439 = vunpack.c.h.b16 %v316
        %v440 = vunpack.c.l.b16 %v317
        %v441 = vunpack.c.h.b16 %v317
        %v442 = vunpack.c.l.b16 %v318
        %v443 = vunpack.c.h.b16 %v318
        %v444 = vunpack.c.l.b16 %v319
        %v445 = vunpack.c.h.b16 %v319
        %v446 = vunpack.c.l.b16 %v320
        %v447 = vunpack.c.h.b16 %v320
        %v448 = vunpack.c.l.b16 %v321
        %v449 = vunpack.c.h.b16 %v321
        %v450 = vpack.c.b16 %v388, %v386
        %v451 = vpack.c.b16 %v389, %v387
        %v452 = vpack.c.b16 %v392, %v390
        %v453 = vpack.c.b16 %v393, %v391
        %v454 = vpack.c.b16 %v396, %v394
        %v455 = vpack.c.b16 %v397, %v395
        %v456 = vpack.c.b16 %v400, %v398
        %v457 = vpack.c.b16 %v401, %v399
        %v458 = vpack.c.b16 %v404, %v402
        %v459 = vpack.c.b16 %v405, %v403
        %v460 = vpack.c.b16 %v408, %v406
        %v461 = vpack.c.b16 %v409, %v407
        %v462 = vpack.c.b16 %v412, %v410
        %v463 = vpack.c.b16 %v413, %v411
        %v464 = vpack.c.b16 %v416, %v414
        %v465 = vpack.c.b16 %v417, %v415
        %v466 = vpack.c.b16 %v420, %v418
        %v467 = vpack.c.b16 %v421, %v419
        %v468 = vpack.c.b16 %v424, %v422
        %v469 = vpack.c.b16 %v425, %v423
        %v470 = vpack.c.b16 %v428, %v426
        %v471 = vpack.c.b16 %v429, %v427
        %v472 = vpack.c.b16 %v432, %v430
        %v473 = vpack.c.b16 %v433, %v431
        %v474 = vpack.c.b16 %v436, %v434
        %v475 = vpack.c.b16 %v437, %v435
        %v476 = vpack.c.b16 %v440, %v438
        %v477 = vpack.c.b16 %v441, %v439
        %v478 = vpack.c.b16 %v444, %v442
        %v479 = vpack.c.b16 %v445, %v443
        %v480 = vpack.c.b16 %v448, %v446
        %v481 = vpack.c.b16 %v449, %v447
        %v546 = vunpack.c.l.b16 %v322
        %v547 = vunpack.c.l.b16 %v323
        %v548 = vunpack.c.l.b16 %v324
        %v549 = vunpack.c.l.b16 %v325
        %v550 = vunpack.c.l.b16 %v326
        %v551 = vunpack.c.l.b16 %v327
        %v552 = vunpack.c.l.b16 %v328
        %v553 = vunpack.c.l.b16 %v329
        %v554 = vunpack.c.l.b16 %v330
        %v555 = vunpack.c.l.b16 %v331
        %v556 = vunpack.c.l.b16 %v332
        %v557 = vunpack.c.l.b16 %v333
        %v558 = vunpack.c.l.b16 %v334
        %v559 = vunpack.c.l.b16 %v335
        %v560 = vunpack.c.l.b16 %v336
        %v561 = vunpack.c.l.b16 %v337
        %v562 = vunpack.c.l.b16 %v338
        %v563 = vunpack.c.l.b16 %v339
        %v564 = vunpack.c.l.b16 %v340
        %v565 = vunpack.c.l.b16 %v341
        %v566 = vunpack.c.l.b16 %v342
        %v567 = vunpack.c.l.b16 %v343
        %v568 = vunpack.c.l.b16 %v344
        %v569 = vunpack.c.l.b16 %v345
        %v570 = vunpack.c.l.b16 %v346
        %v571 = vunpack.c.l.b16 %v347
        %v572 = vunpack.c.l.b16 %v348
        %v573 = vunpack.c.l.b16 %v349
        %v574 = vunpack.c.l.b16 %v350
        %v575 = vunpack.c.l.b16 %v351
        %v576 = vunpack.c.l.b16 %v352
        %v577 = vunpack.c.l.b16 %v353
        %v578 = vpack.c.b16 %v547, %v546
        %v579 = vpack.c.b16 %v549, %v548
        %v580 = vpack.c.b16 %v551, %v550
        %v581 = vpack.c.b16 %v553, %v552
        %v582 = vpack.c.b16 %v555, %v554
        %v583 = vpack.c.b16 %v557, %v556
        %v584 = vpack.c.b16 %v559, %v558
        %v585 = vpack.c.b16 %v561, %v560
        %v586 = vpack.c.b16 %v563, %v562
        %v587 = vpack.c.b16 %v565, %v564
        %v588 = vpack.c.b16 %v567, %v566
        %v589 = vpack.c.b16 %v569, %v568
        %v590 = vpack.c.b16 %v571, %v570
        %v591 = vpack.c.b16 %v573, %v572
        %v592 = vpack.c.b16 %v575, %v574
        %v593 = vpack.c.b16 %v577, %v576
        %610 = vmatpush.bf16.msra.mxu0 %v585
        %611 = vmatpush.bf16.msra.mxu0 %v584
        %612 = vmatpush.bf16.msra.mxu0 %v583
        %613 = vmatpush.bf16.msra.mxu0 %v582
        %614 = vmatpush.bf16.msra.mxu0 %v581
        %615 = vmatpush.bf16.msra.mxu0 %v580
        %616 = vmatpush.bf16.msra.mxu0 %v579
        %617 = vmatpush.bf16.msra.mxu0 %v578
        %618 = vmatmul.bf16.gmra.mxu0 %v450
        %v619 = vpop.f32.mrf.mxu0
        %v620 = vadd.f32 0.0, %v619
        %v621 = vpop.f32.mrf.mxu0
        %v622 = vadd.f32 0.0, %v621
        %623 = vmatmul.bf16.gmra.mxu0 %v452
        %v624 = vpop.f32.mrf.mxu0
        %v625 = vadd.f32 0.0, %v624
        %v626 = vpop.f32.mrf.mxu0
        %v627 = vadd.f32 0.0, %v626
        %628 = vmatmul.bf16.gmra.mxu0 %v454
        %v629 = vpop.f32.mrf.mxu0
        %v630 = vadd.f32 0.0, %v629
        %v631 = vpop.f32.mrf.mxu0
        %v632 = vadd.f32 0.0, %v631
        %633 = vmatmul.bf16.gmra.mxu0 %v456
        %v634 = vpop.f32.mrf.mxu0
        %v635 = vadd.f32 0.0, %v634
        %v636 = vpop.f32.mrf.mxu0
        %v637 = vadd.f32 0.0, %v636
        %638 = vmatmul.bf16.gmra.mxu0 %v458
        %v639 = vpop.f32.mrf.mxu0
        %v640 = vadd.f32 0.0, %v639
        %v641 = vpop.f32.mrf.mxu0
        %v642 = vadd.f32 0.0, %v641
        %643 = vmatmul.bf16.gmra.mxu0 %v460
        %v644 = vpop.f32.mrf.mxu0
        %v645 = vadd.f32 0.0, %v644
        %v646 = vpop.f32.mrf.mxu0
        %v647 = vadd.f32 0.0, %v646
        %648 = vmatmul.bf16.gmra.mxu0 %v462
        %v649 = vpop.f32.mrf.mxu0
        %v650 = vadd.f32 0.0, %v649
        %v651 = vpop.f32.mrf.mxu0
        %v652 = vadd.f32 0.0, %v651
        %653 = vmatmul.bf16.gmra.mxu0 %v464
        %v654 = vpop.f32.mrf.mxu0
        %v655 = vadd.f32 0.0, %v654
        %v656 = vpop.f32.mrf.mxu0
        %v657 = vadd.f32 0.0, %v656
        %658 = vmatmul.bf16.gmra.mxu0 %v466
        %v659 = vpop.f32.mrf.mxu0
        %v660 = vadd.f32 0.0, %v659
        %v661 = vpop.f32.mrf.mxu0
        %v662 = vadd.f32 0.0, %v661
        %663 = vmatmul.bf16.gmra.mxu0 %v468
        %v664 = vpop.f32.mrf.mxu0
        %v665 = vadd.f32 0.0, %v664
        %v666 = vpop.f32.mrf.mxu0
        %v667 = vadd.f32 0.0, %v666
        %668 = vmatmul.bf16.gmra.mxu0 %v470
        %v669 = vpop.f32.mrf.mxu0
        %v670 = vadd.f32 0.0, %v669
        %v671 = vpop.f32.mrf.mxu0
        %v672 = vadd.f32 0.0, %v671
        %673 = vmatmul.bf16.gmra.mxu0 %v472
        %v674 = vpop.f32.mrf.mxu0
        %v675 = vadd.f32 0.0, %v674
        %v676 = vpop.f32.mrf.mxu0
        %v677 = vadd.f32 0.0, %v676
        %678 = vmatmul.bf16.gmra.mxu0 %v474
        %v679 = vpop.f32.mrf.mxu0
        %v680 = vadd.f32 0.0, %v679
        %v681 = vpop.f32.mrf.mxu0
        %v682 = vadd.f32 0.0, %v681
        %683 = vmatmul.bf16.gmra.mxu0 %v476
        %v684 = vpop.f32.mrf.mxu0
        %v685 = vadd.f32 0.0, %v684
        %v686 = vpop.f32.mrf.mxu0
        %v687 = vadd.f32 0.0, %v686
        %688 = vmatmul.bf16.gmra.mxu0 %v478
        %v689 = vpop.f32.mrf.mxu0
        %v690 = vadd.f32 0.0, %v689
        %v691 = vpop.f32.mrf.mxu0
        %v692 = vadd.f32 0.0, %v691
        %693 = vmatmul.bf16.gmra.mxu0 %v480
        %v694 = vpop.f32.mrf.mxu0
        %v695 = vadd.f32 0.0, %v694
        %v696 = vpop.f32.mrf.mxu0
        %v697 = vadd.f32 0.0, %v696
        %698 = vdwg.mxu0
        %699 = vmatpush.bf16.msra.mxu0 %v593
        %700 = vmatpush.bf16.msra.mxu0 %v592
        %701 = vmatpush.bf16.msra.mxu0 %v591
        %702 = vmatpush.bf16.msra.mxu0 %v590
        %703 = vmatpush.bf16.msra.mxu0 %v589
        %704 = vmatpush.bf16.msra.mxu0 %v588
        %705 = vmatpush.bf16.msra.mxu0 %v587
        %706 = vmatpush.bf16.msra.mxu0 %v586
        %707 = vmatmul.bf16.gmra.mxu0 %v451
        %v708 = vpop.f32.mrf.mxu0
        %v709 = vadd.f32 %v620, %v708
        %v710 = vpop.f32.mrf.mxu0
        %v711 = vadd.f32 %v622, %v710
        %712 = vmatmul.bf16.gmra.mxu0 %v453
        %v713 = vpop.f32.mrf.mxu0
        %v714 = vadd.f32 %v625, %v713
        %v715 = vpop.f32.mrf.mxu0
        %v716 = vadd.f32 %v627, %v715
        %717 = vmatmul.bf16.gmra.mxu0 %v455
        %v718 = vpop.f32.mrf.mxu0
        %v719 = vadd.f32 %v630, %v718
        %v720 = vpop.f32.mrf.mxu0
        %v721 = vadd.f32 %v632, %v720
        %722 = vmatmul.bf16.gmra.mxu0 %v457
        %v723 = vpop.f32.mrf.mxu0
        %v724 = vadd.f32 %v635, %v723
        %v725 = vpop.f32.mrf.mxu0
        %v726 = vadd.f32 %v637, %v725
        %727 = vmatmul.bf16.gmra.mxu0 %v459
        %v728 = vpop.f32.mrf.mxu0
        %v729 = vadd.f32 %v640, %v728
        %v730 = vpop.f32.mrf.mxu0
        %v731 = vadd.f32 %v642, %v730
        %732 = vmatmul.bf16.gmra.mxu0 %v461
        %v733 = vpop.f32.mrf.mxu0
        %v734 = vadd.f32 %v645, %v733
        %v735 = vpop.f32.mrf.mxu0
        %v736 = vadd.f32 %v647, %v735
        %737 = vmatmul.bf16.gmra.mxu0 %v463
        %v738 = vpop.f32.mrf.mxu0
        %v739 = vadd.f32 %v650, %v738
        %v740 = vpop.f32.mrf.mxu0
        %v741 = vadd.f32 %v652, %v740
        %742 = vmatmul.bf16.gmra.mxu0 %v465
        %v743 = vpop.f32.mrf.mxu0
        %v744 = vadd.f32 %v655, %v743
        %v745 = vpop.f32.mrf.mxu0
        %v746 = vadd.f32 %v657, %v745
        %747 = vmatmul.bf16.gmra.mxu0 %v467
        %v748 = vpop.f32.mrf.mxu0
        %v749 = vadd.f32 %v660, %v748
        %v750 = vpop.f32.mrf.mxu0
        %v751 = vadd.f32 %v662, %v750
        %752 = vmatmul.bf16.gmra.mxu0 %v469
        %v753 = vpop.f32.mrf.mxu0
        %v754 = vadd.f32 %v665, %v753
        %v755 = vpop.f32.mrf.mxu0
        %v756 = vadd.f32 %v667, %v755
        %757 = vmatmul.bf16.gmra.mxu0 %v471
        %v758 = vpop.f32.mrf.mxu0
        %v759 = vadd.f32 %v670, %v758
        %v760 = vpop.f32.mrf.mxu0
        %v761 = vadd.f32 %v672, %v760
        %762 = vmatmul.bf16.gmra.mxu0 %v473
        %v763 = vpop.f32.mrf.mxu0
        %v764 = vadd.f32 %v675, %v763
        %v765 = vpop.f32.mrf.mxu0
        %v766 = vadd.f32 %v677, %v765
        %767 = vmatmul.bf16.gmra.mxu0 %v475
        %v768 = vpop.f32.mrf.mxu0
        %v769 = vadd.f32 %v680, %v768
        %v770 = vpop.f32.mrf.mxu0
        %v771 = vadd.f32 %v682, %v770
        %772 = vmatmul.bf16.gmra.mxu0 %v477
        %v773 = vpop.f32.mrf.mxu0
        %v774 = vadd.f32 %v685, %v773
        %v775 = vpop.f32.mrf.mxu0
        %v776 = vadd.f32 %v687, %v775
        %777 = vmatmul.bf16.gmra.mxu0 %v479
        %v778 = vpop.f32.mrf.mxu0
        %v779 = vadd.f32 %v690, %v778
        %v780 = vpop.f32.mrf.mxu0
        %v781 = vadd.f32 %v692, %v780
        %782 = vmatmul.bf16.gmra.mxu0 %v481
        %v783 = vpop.f32.mrf.mxu0
        %v784 = vadd.f32 %v695, %v783
        %v785 = vpop.f32.mrf.mxu0
        %v786 = vadd.f32 %v697, %v785
        %787 = vdwg.mxu0
        %v788 = vadd.f32 %v258, %v709
        %v789 = vadd.f32 %v259, %v711
        %v790 = vadd.f32 %v260, %v714
        %v791 = vadd.f32 %v261, %v716
        %v792 = vadd.f32 %v262, %v719
        %v793 = vadd.f32 %v263, %v721
        %v794 = vadd.f32 %v264, %v724
        %v795 = vadd.f32 %v265, %v726
        %v796 = vadd.f32 %v266, %v729
        %v797 = vadd.f32 %v267, %v731
        %v798 = vadd.f32 %v268, %v734
        %v799 = vadd.f32 %v269, %v736
        %v800 = vadd.f32 %v270, %v739
        %v801 = vadd.f32 %v271, %v741
        %v802 = vadd.f32 %v272, %v744
        %v803 = vadd.f32 %v273, %v746
        %v804 = vadd.f32 %v274, %v749
        %v805 = vadd.f32 %v275, %v751
        %v806 = vadd.f32 %v276, %v754
        %v807 = vadd.f32 %v277, %v756
        %v808 = vadd.f32 %v278, %v759
        %v809 = vadd.f32 %v279, %v761
        %v810 = vadd.f32 %v280, %v764
        %v811 = vadd.f32 %v281, %v766
        %v812 = vadd.f32 %v282, %v769
        %v813 = vadd.f32 %v283, %v771
        %v814 = vadd.f32 %v284, %v774
        %v815 = vadd.f32 %v285, %v776
        %v816 = vadd.f32 %v286, %v779
        %v817 = vadd.f32 %v287, %v781
        %v818 = vadd.f32 %v288, %v784
        %v819 = vadd.f32 %v289, %v786
        %820 = vst [vmem:[%s217] sm:$0xff] %v788
        %821 = vst [vmem:[%s217 + $0x8] sm:$0xff] %v789
        %822 = vst [vmem:[%s217 + $0x10] sm:$0xff] %v790
        %823 = vst [vmem:[%s217 + $0x18] sm:$0xff] %v791
        %824 = vst [vmem:[%s217 + $0x20] sm:$0xff] %v792
        %825 = vst [vmem:[%s217 + $0x28] sm:$0xff] %v793
        %826 = vst [vmem:[%s217 + $0x30] sm:$0xff] %v794
        %827 = vst [vmem:[%s217 + $0x38] sm:$0xff] %v795
        %828 = vst [vmem:[%s217 + $0x40] sm:$0xff] %v796
        %829 = vst [vmem:[%s217 + $0x48] sm:$0xff] %v797
        %830 = vst [vmem:[%s217 + $0x50] sm:$0xff] %v798
        %831 = vst [vmem:[%s217 + $0x58] sm:$0xff] %v799
        %832 = vst [vmem:[%s217 + $0x60] sm:$0xff] %v800
        %833 = vst [vmem:[%s217 + $0x68] sm:$0xff] %v801
        %834 = vst [vmem:[%s217 + $0x70] sm:$0xff] %v802
        %835 = vst [vmem:[%s217 + $0x78] sm:$0xff] %v803
        %836 = vst [vmem:[%s217 + $0x80] sm:$0xff] %v804
        %837 = vst [vmem:[%s217 + $0x88] sm:$0xff] %v805
        %838 = vst [vmem:[%s217 + $0x90] sm:$0xff] %v806
        %839 = vst [vmem:[%s217 + $0x98] sm:$0xff] %v807
        %840 = vst [vmem:[%s217 + $0xa0] sm:$0xff] %v808
        %841 = vst [vmem:[%s217 + $0xa8] sm:$0xff] %v809
        %842 = vst [vmem:[%s217 + $0xb0] sm:$0xff] %v810
        %843 = vst [vmem:[%s217 + $0xb8] sm:$0xff] %v811
        %844 = vst [vmem:[%s217 + $0xc0] sm:$0xff] %v812
        %845 = vst [vmem:[%s217 + $0xc8] sm:$0xff] %v813
        %846 = vst [vmem:[%s217 + $0xd0] sm:$0xff] %v814
        %847 = vst [vmem:[%s217 + $0xd8] sm:$0xff] %v815
        %848 = vst [vmem:[%s217 + $0xe0] sm:$0xff] %v816
        %849 = vst [vmem:[%s217 + $0xe8] sm:$0xff] %v817
        %850 = vst [vmem:[%s217 + $0xf0] sm:$0xff] %v818
        %851 = vst [vmem:[%s217 + $0xf8] sm:$0xff] %v819
        %s852 = sand.u32 %s105, 1
        %s853 = scalar_lea.sflag [#allocation4], %s852
        %s854 = sand.u32 %s105, 1
        %s855 = smul.addr %s854, 256
        %s856 = scalar_lea.vmem [#allocation7], %s855
        // Predicated region
        $region41: #{tpu_custom_call.1} parent=27 // pred_check
          %p857 = pneg %p115
        $region42: #{tpu_custom_call.1} parent=27 // pred_check_branch
          %859 = sbr.rel (%p857) target = $region44
        $region43: #{tpu_custom_call.1} parent=27 // pred_region
          %s860 = smul.u32 32, %s25
          %862 = vsyncadd %s853, 0
          %s863 = sadd.s32 %s26, %s860
          %s864 = smul.addr %s863, 8
          %s865 = scalar_lea.hbm %s2, %s864
          %s866 = sshll.u32 %s856, 4
          %s867 = int_to_ptr.vmem [resolvable:$true] %s866
          %s868 = sshll.u32 %s865, 4
          %s869 = int_to_ptr.hbm [resolvable:$true] %s868
          %874 = dma.vmem_to_hbm [thread:$0]  %s867, 4096, %s869, %s853, 128, 128, 8
        $region44: #{tpu_custom_call.1} parent=27 // pred_fallthru
          _
      $region28: #{tpu_custom_call.1} parent=5 // pred_fallthru
        _
      %p875 = scmp.le.s32.totalorder 2, %s15
      // Predicated region
      $region45: #{tpu_custom_call.1} parent=5 // pred_check
        %p876 = pneg %p875
      $region46: #{tpu_custom_call.1} parent=5 // pred_check_branch
        %878 = sbr.rel (%p876) target = $region48
      $region47: #{tpu_custom_call.1} parent=5 // pred_region
        %s879 = ssub.s32 %s15, 2
        // Predicated region
        $region49: #{tpu_custom_call.1} parent=47 // pred_check
          %p880 = pneg %p121
        $region50: #{tpu_custom_call.1} parent=47 // pred_check_branch
          %882 = sbr.rel (%p880) target = $region52
        $region51: #{tpu_custom_call.1} parent=47 // pred_region
          %s883 = sand.u32 %s106, 1
          %s884 = scalar_lea.sflag [#allocation4], %s883
          %s885 = sand.u32 %s106, 1
          %s886 = smul.addr %s885, 256
          %s887 = scalar_lea.vmem [#allocation7], %s886
          %889 = dma.done %s884, 4096
        $region52: #{tpu_custom_call.1} parent=47 // pred_fallthru
          _
      $region48: #{tpu_custom_call.1} parent=5 // pred_fallthru
        _
    $region6: #{tpu_custom_call.1} parent=1 // loop_footer
      %s19 = sadd.s32 1, %s15
    $region7: #{tpu_custom_call.1} parent=1 // loop_footer_branch
      %14 = sbr.rel target = $region3
    $region8: #{tpu_custom_call.1} parent=1 // loop_exit
      _
    %890 = vsyncpa [#allocation3], 1
    %s891 = scalar_lea.sflag [#allocation3], 1
    %892 = vsyncpa %s891, 1
    %893 = vsyncpa [#allocation6], 1
    %894 = vsyncpa [#allocation4], 1
    %s895 = scalar_lea.sflag [#allocation4], 1
    %896 = vsyncpa %s895, 1

</llo_original>
